<compile_context>
chip_gen: v7x
topology: tpu7x:2x2x1
jax: 0.10.0
libtpu: 0.0.40
codegen_flags: <defaults>
</compile_context>

<pallas_src>
import functools

import jax
import jax.numpy as jnp
import numpy as np
from jax.experimental import pallas as pl
from jax.experimental.pallas import tpu as pltpu


# -----------------------------------------------------------------------------
# One-time (init-time) parameter packing.  Weights are static, so this never
# runs in the per-call hot path.
# -----------------------------------------------------------------------------
def pack_resnet_block_params(w1, b1, w2, b2, W):
    """Pack conv weights into banded lane-mixing matrices.

    Lane packing: lane = w * C + c (w-major, channel-minor), width padded so
    L = WP * C is a multiple of 128.  For each kh, a (L, L) band matrix maps
    input lane (w_in, ci) -> output lane (w_out, co), folding the kw spatial
    shift, the zero width-padding and the ci->co channel mix into one MXU
    contraction.  Pad-width lanes are zeroed here so the kernel needs no mask.
    """
    C, _, K, _ = w1.shape
    P = (K - 1) // 2
    assert 128 % C == 0, "lane packing assumes C divides 128"
    WP = (-(-(W * C) // 128) * 128) // C
    L = WP * C

    lane_valid = ((jnp.arange(L) // C) < W).astype(jnp.float32)

    def band(w):
        shift = jnp.stack([jnp.eye(WP, k=P - kw, dtype=jnp.float32)
                           for kw in range(K)])                     # (K, WP, WP)
        blk = jnp.einsum('kwv,oihk->hwivo', shift,
                         w.astype(jnp.float32)).reshape(K, L, L)    # (kh, in, out)
        blk = blk * lane_valid[None, :, None] * lane_valid[None, None, :]
        return blk.astype(jnp.bfloat16)          # bf16 -> single-pass MXU

    def bias(b):
        return (jnp.tile(b.astype(jnp.float32), WP) * lane_valid)[None, :]

    w1f = band(w1).reshape(K * L, L)   # kh taps stacked along the contraction
    w2p = band(w2)                     # (K, L, L): conv2 keeps a 3-tap loop
    return w1f, bias(b1), w2p, bias(b2)


# -----------------------------------------------------------------------------
# Kernel: one image per grid step.
# -----------------------------------------------------------------------------
def _resnet_block_kernel(x3_ref, w1_ref, b1_ref, w2_ref, b2_ref,
                         out_ref, h_ref, *, H, L, K, P, R0):
    # x3_ref : (1, H, K*L) bf16  kh-fused, lane-packed input rows
    # w1_ref : (K*L, L)    bf16  fused conv1 band weights; b1_ref: (1, L) f32
    # w2_ref : (K, L, L)   bf16  conv2 band weights;       b2_ref: (1, L) f32
    # out_ref: (1, H, L)   f32   lane-dense output
    # h_ref  : (HR, L)     f32   scratch; valid rows at [R0, R0+H), halos zero

    # conv1 + bias + ReLU: a single (H, K*L) @ (K*L, L) MXU dot, f32 accum.
    a1 = jnp.dot(x3_ref[0], w1_ref[...], preferred_element_type=jnp.float32)
    h = jnp.maximum(a1 + b1_ref[...], 0.0)

    # Re-zero the two aligned halo bands every step (cheap, and correct for any
    # core assignment / ordering of the "parallel" grid).  Valid rows are fully
    # rewritten; halo rows are never written with data.
    h_ref[0:R0, :] = jnp.zeros((R0, L), jnp.float32)
    h_ref[R0 + H:, :] = jnp.zeros((h_ref.shape[0] - R0 - H, L), jnp.float32)
    h_ref[R0:R0 + H, :] = h

    # conv2: 3 taps, adjacent acc += dot chain (single-pass bf16 operands).
    acc = jnp.dot(h_ref[R0 - P:R0 - P + H, :].astype(jnp.bfloat16),
                  w2_ref[0], preferred_element_type=jnp.float32)
    for kh in range(1, K):
        acc = acc + jnp.dot(
            h_ref[R0 - P + kh:R0 - P + kh + H, :].astype(jnp.bfloat16),
            w2_ref[kh], preferred_element_type=jnp.float32)

    # Bias + residual (the kh == P lane group of x3 is the unshifted input),
    # ReLU, then an aligned lane-dense (H, 128) store.
    resid = x3_ref[0, :, P * L:(P + 1) * L].astype(jnp.float32)
    out_ref[0] = jnp.maximum(acc + b2_ref[...] + resid, 0.0).astype(out_ref.dtype)


# -----------------------------------------------------------------------------
# Jitted forward: only the small activation layout packing + pallas_call.
# (In a real network, activations would stay in the packed layout between
#  layers instead of round-tripping NCHW <-> packed every call.)
# -----------------------------------------------------------------------------
@jax.jit
def resnet_block_forward(x, packed):
    w1f, b1p, w2p, b2p = packed
    N, C, H, W = x.shape
    K, L, _ = w2p.shape
    P = (K - 1) // 2
    WP = L // C
    R0 = 8                       # sublane-aligned start of valid h rows
    assert P <= R0
    HR = R0 + H + 8              # scratch rows: 8-row halo band above & below

    # NCHW -> packed (rows, lanes), bf16 (input data is bf16-representable).
    xt = jnp.transpose(x, (0, 2, 3, 1)).astype(jnp.bfloat16)          # (N,H,W,C)
    xt = jnp.pad(xt, ((0, 0), (P, P), (0, WP - W), (0, 0)))           # (N,H+2P,WP,C)
    xp = xt.reshape(N, H + 2 * P, L)
    # Fuse the K row taps along the lane axis: x3[n, r, kh*L + lane] =
    # xp[n, r + kh, lane]; the kh == P group is the unshifted input (residual).
    x3 = jnp.concatenate([xp[:, kh:kh + H, :] for kh in range(K)], axis=-1)

    kernel = functools.partial(_resnet_block_kernel,
                               H=H, L=L, K=K, P=P, R0=R0)
    out_packed = pl.pallas_call(
        kernel,
        out_shape=jax.ShapeDtypeStruct((N, H, L), x.dtype),
        grid_spec=pltpu.PrefetchScalarGridSpec(
            num_scalar_prefetch=0,
            grid=(N,),
            in_specs=[
                pl.BlockSpec((1, H, K * L), lambda n: (n, 0, 0)),   # fused input
                pl.BlockSpec((K * L, L), lambda n: (0, 0)),         # conv1 weights
                pl.BlockSpec((1, L), lambda n: (0, 0)),             # conv1 bias
                pl.BlockSpec((K, L, L), lambda n: (0, 0, 0)),       # conv2 weights
                pl.BlockSpec((1, L), lambda n: (0, 0)),             # conv2 bias
            ],
            out_specs=pl.BlockSpec((1, H, L), lambda n: (n, 0, 0)),
            scratch_shapes=[pltpu.VMEM((HR, L), jnp.float32)],
        ),
        compiler_params=pltpu.CompilerParams(
            dimension_semantics=("parallel",)),
    )(x3, w1f, b1p, w2p, b2p)

    # Undo the (w, c) lane packing: (N, H, WP*C) -> (N, C, H, W).
    out = out_packed.reshape(N, H, WP, C)[:, :, :W, :]
    return jnp.transpose(out, (0, 3, 1, 2))


def resnet_block_ref(x, w1, b1, w2, b2):
    """Pure-JAX f32 reference matching the PyTorch module exactly."""
    K = w1.shape[-1]
    P = (K - 1) // 2

    def conv(v, w, b):
        y = jax.lax.conv_general_dilated(
            v, w, window_strides=(1, 1), padding=[(P, P), (P, P)],
            dimension_numbers=("NCHW", "OIHW", "NCHW"),
            precision=jax.lax.Precision.HIGHEST)
        return y + b[None, :, None, None]

    h = jax.nn.relu(conv(x, w1, b1))
    return jax.nn.relu(conv(h, w2, b2) + x)


if __name__ == "__main__":
    N, C, H, W, K = 2, 4, 16, 16, 3
    key = jax.random.PRNGKey(0)
    kx, k1, k2, k3, k4 = jax.random.split(key, 5)

    # PyTorch-style init: U(-1/sqrt(fan_in), +1/sqrt(fan_in)); test data snapped
    # to bf16-representable values so the bf16-operand MXU path is lossless on
    # the inputs/weights (documented assumption per the review).
    bound = 1.0 / np.sqrt(C * K * K)
    q = lambda v: v.astype(jnp.bfloat16).astype(jnp.float32)
    x = q(jax.random.normal(kx, (N, C, H, W), jnp.float32))
    w1 = q(jax.random.uniform(k1, (C, C, K, K), jnp.float32, -bound, bound))
    b1 = q(jax.random.uniform(k2, (C,), jnp.float32, -bound, bound))
    w2 = q(jax.random.uniform(k3, (C, C, K, K), jnp.float32, -bound, bound))
    b2 = q(jax.random.uniform(k4, (C,), jnp.float32, -bound, bound))

    # One-time weight packing (init-time; not in the per-call hot path).
    packed = pack_resnet_block_params(w1, b1, w2, b2, W)

    out = jax.block_until_ready(resnet_block_forward(x, packed))
    ref = jax.block_until_ready(resnet_block_ref(x, w1, b1, w2, b2))

    # bf16 MXU operands + f32 accumulation: the only non-exact step is the
    # bf16 truncation of the conv1 activations feeding conv2 (max error well
    # below 1e-3 at these magnitudes), hence the 5e-3 tolerance.
    np.testing.assert_allclose(np.asarray(out), np.asarray(ref),
                               rtol=5e-3, atol=5e-3)
    print("KERNEL_OK")
</pallas_src>

<mosaic_0001>
module attributes {stable_mosaic.version = 11 : i64} {
  func.func @_resnet_block_kernel(%arg0: i32, %arg1: memref<1x16x384xbf16, #tpu.memory_space<vmem>>, %arg2: memref<384x128xbf16, #tpu.memory_space<vmem>>, %arg3: memref<1x128xf32, #tpu.memory_space<vmem>>, %arg4: memref<3x128x128xbf16, #tpu.memory_space<vmem>>, %arg5: memref<1x128xf32, #tpu.memory_space<vmem>>, %arg6: memref<1x16x128xf32, #tpu.memory_space<vmem>>, %arg7: memref<32x128xf32, #tpu.memory_space<vmem>>) attributes {dimension_semantics = [#tpu.dimension_semantics<parallel>], iteration_bounds = array<i64: 2>, scalar_prefetch = 0 : i64, scratch_operands = 1 : i64, tpu.core_type = #tpu.core_type<tc>, window_params = [{transform_indices = @transform_0, window_bounds = array<i64: 1, 16, 384>}, {pipeline_mode = #tpu.pipeline_mode<synchronous>, transform_indices = @transform_1, window_bounds = array<i64: 384, 128>}, {pipeline_mode = #tpu.pipeline_mode<synchronous>, transform_indices = @transform_2, window_bounds = array<i64: 1, 128>}, {pipeline_mode = #tpu.pipeline_mode<synchronous>, transform_indices = @transform_3, window_bounds = array<i64: 3, 128, 128>}, {pipeline_mode = #tpu.pipeline_mode<synchronous>, transform_indices = @transform_4, window_bounds = array<i64: 1, 128>}, {transform_indices = @transform_5, window_bounds = array<i64: 1, 16, 128>}]} {
    %c0 = arith.constant 0 : index
    %c0_0 = arith.constant 0 : index
    %c0_1 = arith.constant 0 : index
    %0 = vector.load %arg1[%c0, %c0_0, %c0_1] : memref<1x16x384xbf16, #tpu.memory_space<vmem>>, vector<1x16x384xbf16>
    %1 = vector.shape_cast %0 : vector<1x16x384xbf16> to vector<16x384xbf16>
    %c0_2 = arith.constant 0 : index
    %c0_3 = arith.constant 0 : index
    %2 = vector.load %arg2[%c0_2, %c0_3] : memref<384x128xbf16, #tpu.memory_space<vmem>>, vector<384x128xbf16>
    %cst = arith.constant dense<0.000000e+00> : vector<16x128xf32>
    %3 = tpu.matmul %1, %2, %cst {dimension_numbers = #tpu.dot_dimension_numbers<[1], [0], [0], [1], [0, 0, 1, 1], [], []>} : vector<16x384xbf16>, vector<384x128xbf16>, vector<16x128xf32> -> vector<16x128xf32>
    %c0_4 = arith.constant 0 : index
    %c0_5 = arith.constant 0 : index
    %4 = vector.load %arg3[%c0_4, %c0_5] : memref<1x128xf32, #tpu.memory_space<vmem>>, vector<1x128xf32>
    %5 = vector.broadcast %4 : vector<1x128xf32> to vector<16x128xf32>
    %6 = arith.addf %3, %5 : vector<16x128xf32>
    %cst_6 = arith.constant 0.000000e+00 : f32
    %7 = vector.broadcast %cst_6 : f32 to vector<16x128xf32>
    %8 = arith.maximumf %6, %7 : vector<16x128xf32>
    %cst_7 = arith.constant 0.000000e+00 : f32
    %9 = vector.broadcast %cst_7 : f32 to vector<8x128xf32>
    %c0_8 = arith.constant 0 : index
    %c0_9 = arith.constant 0 : index
    %10 = vector.load %arg7[%c0_8, %c0_9] : memref<32x128xf32, #tpu.memory_space<vmem>>, vector<8x128xf32>
    tpu.vector_store %arg7[%c0_8, %c0_9], %9 {strides = array<i32>} : memref<32x128xf32, #tpu.memory_space<vmem>>, vector<8x128xf32>,
    %cst_10 = arith.constant 0.000000e+00 : f32
    %11 = vector.broadcast %cst_10 : f32 to vector<8x128xf32>
    %c24 = arith.constant 24 : index
    %c0_11 = arith.constant 0 : index
    %12 = vector.load %arg7[%c24, %c0_11] : memref<32x128xf32, #tpu.memory_space<vmem>>, vector<8x128xf32>
    tpu.vector_store %arg7[%c24, %c0_11], %11 {strides = array<i32>} : memref<32x128xf32, #tpu.memory_space<vmem>>, vector<8x128xf32>,
    %c8 = arith.constant 8 : index
    %c0_12 = arith.constant 0 : index
    %13 = vector.load %arg7[%c8, %c0_12] : memref<32x128xf32, #tpu.memory_space<vmem>>, vector<16x128xf32>
    tpu.vector_store %arg7[%c8, %c0_12], %8 {strides = array<i32>} : memref<32x128xf32, #tpu.memory_space<vmem>>, vector<16x128xf32>,
    %c7 = arith.constant 7 : index
    %c0_13 = arith.constant 0 : index
    %14 = vector.load %arg7[%c7, %c0_13] : memref<32x128xf32, #tpu.memory_space<vmem>>, vector<16x128xf32>
    %15 = arith.truncf %14 : vector<16x128xf32> to vector<16x128xbf16>
    %c0_14 = arith.constant 0 : index
    %c0_15 = arith.constant 0 : index
    %c0_16 = arith.constant 0 : index
    %16 = vector.load %arg4[%c0_14, %c0_15, %c0_16] : memref<3x128x128xbf16, #tpu.memory_space<vmem>>, vector<1x128x128xbf16>
    %17 = vector.shape_cast %16 : vector<1x128x128xbf16> to vector<128x128xbf16>
    %cst_17 = arith.constant dense<0.000000e+00> : vector<16x128xf32>
    %18 = tpu.matmul %15, %17, %cst_17 {dimension_numbers = #tpu.dot_dimension_numbers<[1], [0], [0], [1], [0, 0, 1, 1], [], []>} : vector<16x128xbf16>, vector<128x128xbf16>, vector<16x128xf32> -> vector<16x128xf32>
    %c8_18 = arith.constant 8 : index
    %c0_19 = arith.constant 0 : index
    %19 = vector.load %arg7[%c8_18, %c0_19] : memref<32x128xf32, #tpu.memory_space<vmem>>, vector<16x128xf32>
    %20 = arith.truncf %19 : vector<16x128xf32> to vector<16x128xbf16>
    %c1 = arith.constant 1 : index
    %c0_20 = arith.constant 0 : index
    %c0_21 = arith.constant 0 : index
    %21 = vector.load %arg4[%c1, %c0_20, %c0_21] : memref<3x128x128xbf16, #tpu.memory_space<vmem>>, vector<1x128x128xbf16>
    %22 = vector.shape_cast %21 : vector<1x128x128xbf16> to vector<128x128xbf16>
    %cst_22 = arith.constant dense<0.000000e+00> : vector<16x128xf32>
    %23 = tpu.matmul %20, %22, %cst_22 {dimension_numbers = #tpu.dot_dimension_numbers<[1], [0], [0], [1], [0, 0, 1, 1], [], []>} : vector<16x128xbf16>, vector<128x128xbf16>, vector<16x128xf32> -> vector<16x128xf32>
    %24 = arith.addf %18, %23 : vector<16x128xf32>
    %c9 = arith.constant 9 : index
    %c0_23 = arith.constant 0 : index
    %25 = vector.load %arg7[%c9, %c0_23] : memref<32x128xf32, #tpu.memory_space<vmem>>, vector<16x128xf32>
    %26 = arith.truncf %25 : vector<16x128xf32> to vector<16x128xbf16>
    %c2 = arith.constant 2 : index
    %c0_24 = arith.constant 0 : index
    %c0_25 = arith.constant 0 : index
    %27 = vector.load %arg4[%c2, %c0_24, %c0_25] : memref<3x128x128xbf16, #tpu.memory_space<vmem>>, vector<1x128x128xbf16>
    %28 = vector.shape_cast %27 : vector<1x128x128xbf16> to vector<128x128xbf16>
    %cst_26 = arith.constant dense<0.000000e+00> : vector<16x128xf32>
    %29 = tpu.matmul %26, %28, %cst_26 {dimension_numbers = #tpu.dot_dimension_numbers<[1], [0], [0], [1], [0, 0, 1, 1], [], []>} : vector<16x128xbf16>, vector<128x128xbf16>, vector<16x128xf32> -> vector<16x128xf32>
    %30 = arith.addf %24, %29 : vector<16x128xf32>
    %c0_27 = arith.constant 0 : index
    %c0_28 = arith.constant 0 : index
    %c128 = arith.constant 128 : index
    %31 = vector.load %arg1[%c0_27, %c0_28, %c128] : memref<1x16x384xbf16, #tpu.memory_space<vmem>>, vector<1x16x128xbf16>
    %32 = vector.shape_cast %31 : vector<1x16x128xbf16> to vector<16x128xbf16>
    %33 = arith.extf %32 : vector<16x128xbf16> to vector<16x128xf32>
    %c0_29 = arith.constant 0 : index
    %c0_30 = arith.constant 0 : index
    %34 = vector.load %arg5[%c0_29, %c0_30] : memref<1x128xf32, #tpu.memory_space<vmem>>, vector<1x128xf32>
    %35 = vector.broadcast %34 : vector<1x128xf32> to vector<16x128xf32>
    %36 = arith.addf %30, %35 : vector<16x128xf32>
    %37 = arith.addf %36, %33 : vector<16x128xf32>
    %cst_31 = arith.constant 0.000000e+00 : f32
    %38 = vector.broadcast %cst_31 : f32 to vector<16x128xf32>
    %39 = arith.maximumf %37, %38 : vector<16x128xf32>
    %c0_32 = arith.constant 0 : index
    %c0_33 = arith.constant 0 : index
    %c0_34 = arith.constant 0 : index
    %40 = vector.load %arg6[%c0_32, %c0_33, %c0_34] : memref<1x16x128xf32, #tpu.memory_space<vmem>>, vector<1x16x128xf32>
    %41 = vector.shape_cast %40 : vector<1x16x128xf32> to vector<16x128xf32>
    %42 = vector.shape_cast %39 : vector<16x128xf32> to vector<1x16x128xf32>
    tpu.vector_store %arg6[%c0_32, %c0_33, %c0_34], %42 {strides = array<i32>} : memref<1x16x128xf32, #tpu.memory_space<vmem>>, vector<1x16x128xf32>,
    return
  }
  func.func @transform_0(%arg0: i32) -> (i32, i32, i32) {
    %c0_i32 = arith.constant 0 : i32
    %c0_i32_0 = arith.constant 0 : i32
    %c0_i32_1 = arith.constant 0 : i32
    return %arg0, %c0_i32, %c0_i32_0 : i32, i32, i32
  }
  func.func @transform_1(%arg0: i32) -> (i32, i32) {
    %c0_i32 = arith.constant 0 : i32
    %c0_i32_0 = arith.constant 0 : i32
    %c0_i32_1 = arith.constant 0 : i32
    return %c0_i32, %c0_i32_0 : i32, i32
  }
  func.func @transform_2(%arg0: i32) -> (i32, i32) {
    %c0_i32 = arith.constant 0 : i32
    %c0_i32_0 = arith.constant 0 : i32
    %c0_i32_1 = arith.constant 0 : i32
    return %c0_i32, %c0_i32_0 : i32, i32
  }
  func.func @transform_3(%arg0: i32) -> (i32, i32, i32) {
    %c0_i32 = arith.constant 0 : i32
    %c0_i32_0 = arith.constant 0 : i32
    %c0_i32_1 = arith.constant 0 : i32
    %c0_i32_2 = arith.constant 0 : i32
    return %c0_i32, %c0_i32_0, %c0_i32_1 : i32, i32, i32
  }
  func.func @transform_4(%arg0: i32) -> (i32, i32) {
    %c0_i32 = arith.constant 0 : i32
    %c0_i32_0 = arith.constant 0 : i32
    %c0_i32_1 = arith.constant 0 : i32
    return %c0_i32, %c0_i32_0 : i32, i32
  }
  func.func @transform_5(%arg0: i32) -> (i32, i32, i32) {
    %c0_i32 = arith.constant 0 : i32
    %c0_i32_0 = arith.constant 0 : i32
    %c0_i32_1 = arith.constant 0 : i32
    return %arg0, %c0_i32, %c0_i32_0 : i32, i32, i32
  }
}

</mosaic_0001>

<llo_original>
// kernel: resnet_block_forward.1
$region0: #{resnet_block_forward.1}
  #allocation0 [shape = 'u32[]', space=smem, size = 0x4, offset = 0x4, fixed_abs, tag = 'smem constant byte address 0x4 - core index']
  #allocation1 [shape = 'u32[144,128]{1,0:T(1,128)}', space=vmem, size = 0x12000, scoped, tag = 'internal scratch']
  #allocation2 [shape = 'f32[32,128]{1,0:T(8,128)}', space=vmem, size = 0x4000, scoped, tag = 'scratch operand']
  %s0 = inlined_call_operand.vmem [shape: bf16[2,16,384], index: 0, kind: input, shape index: {}]
  %s1 = inlined_call_operand.vmem [shape: bf16[384,128], index: 1, kind: input, shape index: {}]
  %s2 = inlined_call_operand.vmem [shape: f32[1,128], index: 2, kind: input, shape index: {}]
  %s3 = inlined_call_operand.vmem [shape: bf16[3,128,128], index: 3, kind: input, shape index: {}]
  %s4 = inlined_call_operand.vmem [shape: f32[1,128], index: 4, kind: input, shape index: {}]
  %s5 = inlined_call_operand.vmem [shape: f32[2,16,128], index: 5, kind: output, shape index: {}]
  %s6 = sld [smem:[#allocation0]]
  $region53: #{resnet_block_forward.1} parent=0
    _
  %s8 = ssub.s32 1, %s6
  %s9 = scalar_select 0, %s8, %s6
  loop: start=0, step=1, limit=4
  $region2: #{resnet_block_forward.1} parent=0 // loop_pre_header
    _
  $region3: #{resnet_block_forward.1} parent=0 // loop_header
    %s11 = sphi 0, %s15
    %p12 = scmp.ge.s32.totalorder %s11, 4
    %s21 = sphi 0, %s23
    %s24 = sphi 0, %s21
    %s25 = sphi 0, %s24
    %s41 = sphi 0, %s25
    %s45 = sphi 0, %s45
    %s47 = sphi 0, %s45
    %s48 = sphi 0, %s47
    %s62 = sphi 0, %s48
    %s66 = sphi 0, %s66
    %s68 = sphi 0, %s66
    %s69 = sphi 0, %s68
    %s83 = sphi 0, %s69
    %s87 = sphi 0, %s87
    %s89 = sphi 0, %s87
    %s90 = sphi 0, %s89
    %s104 = sphi 0, %s90
    %s108 = sphi 0, %s108
    %s110 = sphi 0, %s108
    %s111 = sphi 0, %s110
    %s125 = sphi 0, %s111
    %s131 = sphi 0, %s133
    %s134 = sphi 0, %s131
    %s135 = sphi 0, %s134
    %s151 = sphi 0, %s135
  $region4: #{resnet_block_forward.1} parent=0 // loop_header_branch
    %14 = sbr.rel (%p12) target = $region8
  $region5: #{resnet_block_forward.1} parent=0 // loop_body
    %s16 = ssub.s32 %s11, 1
    %s17 = ssub.s32 %s11, 2
    %s18 = sadd.s32 %s11, 1
    %s19 = ssub.s32 %s11, %s18
    %p20 = scmp.eq.s32.totalorder %s19, 0
    %s22 = sadd.s32 %s21, 1
    %s23 = scalar_select %p20, %s21, %s22
    %p26 = pneg %p20
    %p27 = scmp.eq.s32.totalorder %s11, 1
    %p28 = por %p26, %p27
    %p29 = scmp.ne.s32.totalorder %s21, %s24
    %p30 = scmp.eq.s32.totalorder %s11, 0
    %p31 = por %p29, %p30
    %p32 = scmp.ne.s32.totalorder %s21, %s24
    %p33 = scmp.eq.s32.totalorder %s16, 1
    %p34 = por %p32, %p33
    %p35 = scmp.ne.s32.totalorder %s24, %s25
    %p36 = scmp.eq.s32.totalorder %s16, 0
    %p37 = por %p35, %p36
    %p38 = scmp.ne.s32.totalorder %s24, %s25
    %p39 = scmp.eq.s32.totalorder %s17, 1
    %p40 = por %p38, %p39
    %p42 = scmp.ne.s32.totalorder %s25, %s41
    %p43 = scmp.eq.s32.totalorder %s17, 0
    %p44 = por %p42, %p43
    %s46 = sadd.s32 %s45, 1
    %p49 = scmp.eq.s32.totalorder %s11, 1
    %p50 = scmp.ne.s32.totalorder %s45, %s47
    %p51 = scmp.eq.s32.totalorder %s11, 0
    %p52 = por %p50, %p51
    %p53 = scmp.ne.s32.totalorder %s45, %s47
    %p54 = scmp.eq.s32.totalorder %s16, 1
    %p55 = por %p53, %p54
    %p56 = scmp.ne.s32.totalorder %s47, %s48
    %p57 = scmp.eq.s32.totalorder %s16, 0
    %p58 = por %p56, %p57
    %p59 = scmp.ne.s32.totalorder %s47, %s48
    %p60 = scmp.eq.s32.totalorder %s17, 1
    %p61 = por %p59, %p60
    %p63 = scmp.ne.s32.totalorder %s48, %s62
    %p64 = scmp.eq.s32.totalorder %s17, 0
    %p65 = por %p63, %p64
    %s67 = sadd.s32 %s66, 1
    %p70 = scmp.eq.s32.totalorder %s11, 1
    %p71 = scmp.ne.s32.totalorder %s66, %s68
    %p72 = scmp.eq.s32.totalorder %s11, 0
    %p73 = por %p71, %p72
    %p74 = scmp.ne.s32.totalorder %s66, %s68
    %p75 = scmp.eq.s32.totalorder %s16, 1
    %p76 = por %p74, %p75
    %p77 = scmp.ne.s32.totalorder %s68, %s69
    %p78 = scmp.eq.s32.totalorder %s16, 0
    %p79 = por %p77, %p78
    %p80 = scmp.ne.s32.totalorder %s68, %s69
    %p81 = scmp.eq.s32.totalorder %s17, 1
    %p82 = por %p80, %p81
    %p84 = scmp.ne.s32.totalorder %s69, %s83
    %p85 = scmp.eq.s32.totalorder %s17, 0
    %p86 = por %p84, %p85
    %s88 = sadd.s32 %s87, 1
    %p91 = scmp.eq.s32.totalorder %s11, 1
    %p92 = scmp.ne.s32.totalorder %s87, %s89
    %p93 = scmp.eq.s32.totalorder %s11, 0
    %p94 = por %p92, %p93
    %p95 = scmp.ne.s32.totalorder %s87, %s89
    %p96 = scmp.eq.s32.totalorder %s16, 1
    %p97 = por %p95, %p96
    %p98 = scmp.ne.s32.totalorder %s89, %s90
    %p99 = scmp.eq.s32.totalorder %s16, 0
    %p100 = por %p98, %p99
    %p101 = scmp.ne.s32.totalorder %s89, %s90
    %p102 = scmp.eq.s32.totalorder %s17, 1
    %p103 = por %p101, %p102
    %p105 = scmp.ne.s32.totalorder %s90, %s104
    %p106 = scmp.eq.s32.totalorder %s17, 0
    %p107 = por %p105, %p106
    %s109 = sadd.s32 %s108, 1
    %p112 = scmp.eq.s32.totalorder %s11, 1
    %p113 = scmp.ne.s32.totalorder %s108, %s110
    %p114 = scmp.eq.s32.totalorder %s11, 0
    %p115 = por %p113, %p114
    %p116 = scmp.ne.s32.totalorder %s108, %s110
    %p117 = scmp.eq.s32.totalorder %s16, 1
    %p118 = por %p116, %p117
    %p119 = scmp.ne.s32.totalorder %s110, %s111
    %p120 = scmp.eq.s32.totalorder %s16, 0
    %p121 = por %p119, %p120
    %p122 = scmp.ne.s32.totalorder %s110, %s111
    %p123 = scmp.eq.s32.totalorder %s17, 1
    %p124 = por %p122, %p123
    %p126 = scmp.ne.s32.totalorder %s111, %s125
    %p127 = scmp.eq.s32.totalorder %s17, 0
    %p128 = por %p126, %p127
    %s129 = ssub.s32 %s11, %s18
    %p130 = scmp.eq.s32.totalorder %s129, 0
    %s132 = sadd.s32 %s131, 1
    %s133 = scalar_select %p130, %s131, %s132
    %p136 = pneg %p130
    %p137 = scmp.eq.s32.totalorder %s11, 1
    %p138 = por %p136, %p137
    %p139 = scmp.ne.s32.totalorder %s131, %s134
    %p140 = scmp.eq.s32.totalorder %s11, 0
    %p141 = por %p139, %p140
    %p142 = scmp.ne.s32.totalorder %s131, %s134
    %p143 = scmp.eq.s32.totalorder %s16, 1
    %p144 = por %p142, %p143
    %p145 = scmp.ne.s32.totalorder %s134, %s135
    %p146 = scmp.eq.s32.totalorder %s16, 0
    %p147 = por %p145, %p146
    %p148 = scmp.ne.s32.totalorder %s134, %s135
    %p149 = scmp.eq.s32.totalorder %s17, 1
    %p150 = por %p148, %p149
    %p152 = scmp.ne.s32.totalorder %s135, %s151
    %p153 = scmp.eq.s32.totalorder %s17, 0
    %p154 = por %p152, %p153
    %p155 = scmp.le.s32.totalorder 1, %s11
    %p156 = scmp.lt.s32.totalorder %s11, 3
    %p157 = pnand %p155, %p156
    %p158 = pneg %p157
    // Predicated region
    $region9: #{resnet_block_forward.1} parent=5 // pred_check
      _
    $region10: #{resnet_block_forward.1} parent=5 // pred_check_branch
      %160 = sbr.rel (%p157) target = $region12
    $region11: #{resnet_block_forward.1} parent=5 // pred_region
      %s161 = ssub.s32 %s11, 1
      // Predicated region
      $region13: #{resnet_block_forward.1} parent=11 // pred_check
        %p162 = pneg %p58
      $region14: #{resnet_block_forward.1} parent=11 // pred_check_branch
        %164 = sbr.rel (%p162) target = $region16
      $region15: #{resnet_block_forward.1} parent=11 // pred_region
        _
      $region16: #{resnet_block_forward.1} parent=11 // pred_fallthru
        _
      // Predicated region
      $region17: #{resnet_block_forward.1} parent=11 // pred_check
        %p165 = pneg %p79
      $region18: #{resnet_block_forward.1} parent=11 // pred_check_branch
        %167 = sbr.rel (%p165) target = $region20
      $region19: #{resnet_block_forward.1} parent=11 // pred_region
        _
      $region20: #{resnet_block_forward.1} parent=11 // pred_fallthru
        _
      // Predicated region
      $region21: #{resnet_block_forward.1} parent=11 // pred_check
        %p168 = pneg %p100
      $region22: #{resnet_block_forward.1} parent=11 // pred_check_branch
        %170 = sbr.rel (%p168) target = $region24
      $region23: #{resnet_block_forward.1} parent=11 // pred_region
        _
      $region24: #{resnet_block_forward.1} parent=11 // pred_fallthru
        _
      // Predicated region
      $region25: #{resnet_block_forward.1} parent=11 // pred_check
        %p171 = pneg %p121
      $region26: #{resnet_block_forward.1} parent=11 // pred_check_branch
        %173 = sbr.rel (%p171) target = $region28
      $region27: #{resnet_block_forward.1} parent=11 // pred_region
        _
      $region28: #{resnet_block_forward.1} parent=11 // pred_fallthru
        _
    $region12: #{resnet_block_forward.1} parent=5 // pred_fallthru
      _
    %p174 = scmp.lt.s32.totalorder %s11, 2
    // Predicated region
    $region29: #{resnet_block_forward.1} parent=5 // pred_check
      %p175 = pneg %p174
    $region30: #{resnet_block_forward.1} parent=5 // pred_check_branch
      %177 = sbr.rel (%p175) target = $region32
    $region31: #{resnet_block_forward.1} parent=5 // pred_region
      // Predicated region
      $region33: #{resnet_block_forward.1} parent=31 // pred_check
        %p178 = pneg %p31
      $region34: #{resnet_block_forward.1} parent=31 // pred_check_branch
        %180 = sbr.rel (%p178) target = $region36
      $region35: #{resnet_block_forward.1} parent=31 // pred_region
        %p181 = scmp.lt.s32.totalorder %s11, 1
        %s182 = scalar_select %p181, %s11, 1
        %s183 = smul.addr %s182, 6
        %s184 = smul.addr %s183, 4
        %s185 = scalar_lea.vmem %s0, %s184
      $region36: #{resnet_block_forward.1} parent=31 // pred_fallthru
        _
    $region32: #{resnet_block_forward.1} parent=5 // pred_fallthru
      _
    %p186 = scmp.le.s32.totalorder 1, %s11
    %p187 = scmp.lt.s32.totalorder %s11, 3
    %p188 = pnand %p186, %p187
    %p189 = pneg %p188
    // Predicated region
    $region37: #{resnet_block_forward.1} parent=5 // pred_check
      _
    $region38: #{resnet_block_forward.1} parent=5 // pred_check_branch
      %191 = sbr.rel (%p188) target = $region40
    $region39: #{resnet_block_forward.1} parent=5 // pred_region
      %s192 = ssub.s32 %s11, 1
      %p193 = scmp.lt.s32.totalorder %s16, 1
      %s194 = scalar_select %p193, %s16, 1
      %s195 = smul.addr %s194, 6
      %s196 = smul.addr %s195, 4
      %s197 = scalar_lea.vmem %s0, %s196
      %p198 = pneg %p37
      %p199 = pneg %p34
      %p200 = pneg %p58
      %p201 = pneg %p55
      %p202 = pneg %p79
      %p203 = pneg %p76
      %p204 = pneg %p100
      %p205 = pneg %p97
      %p206 = pneg %p121
      %p207 = pneg %p118
      %p208 = pneg %p147
      %p209 = pneg %p144
      %p210 = scmp.lt.s32.totalorder %s16, 1
      %s211 = scalar_select %p210, %s16, 1
      %s212 = smul.addr %s211, 2
      %s213 = smul.addr %s212, 8
      %s214 = scalar_lea.vmem %s5, %s213
      %p215 = scmp.lt.s32.totalorder %s16, 1
      %s216 = scalar_select %p215, %s16, 1
      %s217 = smul.addr %s216, 6
      %s218 = smul.addr %s217, 4
      %s219 = scalar_lea.vmem %s0, %s218
      %p220 = scmp.lt.s32.totalorder %s16, 1
      %s221 = scalar_select %p220, %s16, 1
      %s222 = smul.addr %s221, 2
      %s223 = smul.addr %s222, 8
      %s224 = scalar_lea.vmem %s5, %s223
      %v226 = vld [vmem:[%s219] sm:$0xff]
      %v227 = vld [vmem:[%s219 + $0x8] sm:$0xf]
      %v228 = vld [vmem:[%s219 + $0xc] sm:$0xff]
      %v229 = vld [vmem:[%s219 + $0x14] sm:$0xf]
      %v230 = vld [vmem:[%s1] sm:$0xf]
      %v231 = vld [vmem:[%s1 + $0x4] sm:$0xf]
      %v232 = vld [vmem:[%s1 + $0x8] sm:$0xf]
      %v233 = vld [vmem:[%s1 + $0xc] sm:$0xf]
      %v234 = vld [vmem:[%s1 + $0x10] sm:$0xf]
      %v235 = vld [vmem:[%s1 + $0x14] sm:$0xf]
      %v236 = vld [vmem:[%s1 + $0x18] sm:$0xf]
      %v237 = vld [vmem:[%s1 + $0x1c] sm:$0xf]
      %v238 = vld [vmem:[%s1 + $0x20] sm:$0xf]
      %v239 = vld [vmem:[%s1 + $0x24] sm:$0xf]
      %v240 = vld [vmem:[%s1 + $0x28] sm:$0xf]
      %v241 = vld [vmem:[%s1 + $0x2c] sm:$0xf]
      %v242 = vld [vmem:[%s1 + $0x30] sm:$0xf]
      %v243 = vld [vmem:[%s1 + $0x34] sm:$0xf]
      %v244 = vld [vmem:[%s1 + $0x38] sm:$0xf]
      %v245 = vld [vmem:[%s1 + $0x3c] sm:$0xf]
      %v246 = vld [vmem:[%s1 + $0x40] sm:$0xf]
      %v247 = vld [vmem:[%s1 + $0x44] sm:$0xf]
      %v248 = vld [vmem:[%s1 + $0x48] sm:$0xf]
      %v249 = vld [vmem:[%s1 + $0x4c] sm:$0xf]
      %v250 = vld [vmem:[%s1 + $0x50] sm:$0xf]
      %v251 = vld [vmem:[%s1 + $0x54] sm:$0xf]
      %v252 = vld [vmem:[%s1 + $0x58] sm:$0xf]
      %v253 = vld [vmem:[%s1 + $0x5c] sm:$0xf]
      %v254 = vld [vmem:[%s1 + $0x60] sm:$0xf]
      %v255 = vld [vmem:[%s1 + $0x64] sm:$0xf]
      %v256 = vld [vmem:[%s1 + $0x68] sm:$0xf]
      %v257 = vld [vmem:[%s1 + $0x6c] sm:$0xf]
      %v258 = vld [vmem:[%s1 + $0x70] sm:$0xf]
      %v259 = vld [vmem:[%s1 + $0x74] sm:$0xf]
      %v260 = vld [vmem:[%s1 + $0x78] sm:$0xf]
      %v261 = vld [vmem:[%s1 + $0x7c] sm:$0xf]
      %v262 = vld [vmem:[%s1 + $0x80] sm:$0xf]
      %v263 = vld [vmem:[%s1 + $0x84] sm:$0xf]
      %v264 = vld [vmem:[%s1 + $0x88] sm:$0xf]
      %v265 = vld [vmem:[%s1 + $0x8c] sm:$0xf]
      %v266 = vld [vmem:[%s1 + $0x90] sm:$0xf]
      %v267 = vld [vmem:[%s1 + $0x94] sm:$0xf]
      %v268 = vld [vmem:[%s1 + $0x98] sm:$0xf]
      %v269 = vld [vmem:[%s1 + $0x9c] sm:$0xf]
      %v270 = vld [vmem:[%s1 + $0xa0] sm:$0xf]
      %v271 = vld [vmem:[%s1 + $0xa4] sm:$0xf]
      %v272 = vld [vmem:[%s1 + $0xa8] sm:$0xf]
      %v273 = vld [vmem:[%s1 + $0xac] sm:$0xf]
      %v274 = vld [vmem:[%s1 + $0xb0] sm:$0xf]
      %v275 = vld [vmem:[%s1 + $0xb4] sm:$0xf]
      %v276 = vld [vmem:[%s1 + $0xb8] sm:$0xf]
      %v277 = vld [vmem:[%s1 + $0xbc] sm:$0xf]
      %v278 = vld [vmem:[%s2] sm:$0x1]
      %v280 = vlaneseq
      %v281 = vshrl.u32 %v280, 7
      %v282 = vsub.s32 0, %v281
      %v283 = vrot.slane %v278, %v282
      %v289 = vunpack.c.l.b16 %v226
      %v290 = vunpack.c.h.b16 %v226
      %v291 = vunpack.c.l.b16 %v227
      %v292 = vunpack.c.l.b16 %v228
      %v293 = vunpack.c.h.b16 %v228
      %v294 = vunpack.c.l.b16 %v229
      %v295 = vpack.c.b16 %v292, %v289
      %v296 = vpack.c.b16 %v293, %v290
      %v297 = vpack.c.b16 %v294, %v291
      %v349 = vunpack.c.l.b16 %v230
      %v350 = vunpack.c.l.b16 %v231
      %v351 = vunpack.c.l.b16 %v232
      %v352 = vunpack.c.l.b16 %v233
      %v353 = vunpack.c.l.b16 %v234
      %v354 = vunpack.c.l.b16 %v235
      %v355 = vunpack.c.l.b16 %v236
      %v356 = vunpack.c.l.b16 %v237
      %v357 = vunpack.c.l.b16 %v238
      %v358 = vunpack.c.l.b16 %v239
      %v359 = vunpack.c.l.b16 %v240
      %v360 = vunpack.c.l.b16 %v241
      %v361 = vunpack.c.l.b16 %v242
      %v362 = vunpack.c.l.b16 %v243
      %v363 = vunpack.c.l.b16 %v244
      %v364 = vunpack.c.l.b16 %v245
      %v365 = vunpack.c.l.b16 %v246
      %v366 = vunpack.c.l.b16 %v247
      %v367 = vunpack.c.l.b16 %v248
      %v368 = vunpack.c.l.b16 %v249
      %v369 = vunpack.c.l.b16 %v250
      %v370 = vunpack.c.l.b16 %v251
      %v371 = vunpack.c.l.b16 %v252
      %v372 = vunpack.c.l.b16 %v253
      %v373 = vunpack.c.l.b16 %v254
      %v374 = vunpack.c.l.b16 %v255
      %v375 = vunpack.c.l.b16 %v256
      %v376 = vunpack.c.l.b16 %v257
      %v377 = vunpack.c.l.b16 %v258
      %v378 = vunpack.c.l.b16 %v259
      %v379 = vunpack.c.l.b16 %v260
      %v380 = vunpack.c.l.b16 %v261
      %v381 = vunpack.c.l.b16 %v262
      %v382 = vunpack.c.l.b16 %v263
      %v383 = vunpack.c.l.b16 %v264
      %v384 = vunpack.c.l.b16 %v265
      %v385 = vunpack.c.l.b16 %v266
      %v386 = vunpack.c.l.b16 %v267
      %v387 = vunpack.c.l.b16 %v268
      %v388 = vunpack.c.l.b16 %v269
      %v389 = vunpack.c.l.b16 %v270
      %v390 = vunpack.c.l.b16 %v271
      %v391 = vunpack.c.l.b16 %v272
      %v392 = vunpack.c.l.b16 %v273
      %v393 = vunpack.c.l.b16 %v274
      %v394 = vunpack.c.l.b16 %v275
      %v395 = vunpack.c.l.b16 %v276
      %v396 = vunpack.c.l.b16 %v277
      %v397 = vpack.c.b16 %v350, %v349
      %v398 = vpack.c.b16 %v352, %v351
      %v399 = vpack.c.b16 %v354, %v353
      %v400 = vpack.c.b16 %v356, %v355
      %v401 = vpack.c.b16 %v358, %v357
      %v402 = vpack.c.b16 %v360, %v359
      %v403 = vpack.c.b16 %v362, %v361
      %v404 = vpack.c.b16 %v364, %v363
      %v405 = vpack.c.b16 %v366, %v365
      %v406 = vpack.c.b16 %v368, %v367
      %v407 = vpack.c.b16 %v370, %v369
      %v408 = vpack.c.b16 %v372, %v371
      %v409 = vpack.c.b16 %v374, %v373
      %v410 = vpack.c.b16 %v376, %v375
      %v411 = vpack.c.b16 %v378, %v377
      %v412 = vpack.c.b16 %v380, %v379
      %v413 = vpack.c.b16 %v382, %v381
      %v414 = vpack.c.b16 %v384, %v383
      %v415 = vpack.c.b16 %v386, %v385
      %v416 = vpack.c.b16 %v388, %v387
      %v417 = vpack.c.b16 %v390, %v389
      %v418 = vpack.c.b16 %v392, %v391
      %v419 = vpack.c.b16 %v394, %v393
      %v420 = vpack.c.b16 %v396, %v395
      %445 = vmatprep.subr.bf16.mxu0 0
      %446 = vmatpush1.bf16.msra.mxu0 %v397
      %447 = vmatprep.subr.bf16.mxu0 0
      %448 = vmatpush1.bf16.msra.mxu0 %v398
      %449 = vmatprep.subr.bf16.mxu0 0
      %450 = vmatpush1.bf16.msra.mxu0 %v399
      %451 = vmatprep.subr.bf16.mxu0 0
      %452 = vmatpush1.bf16.msra.mxu0 %v400
      %453 = vmatprep.subr.bf16.mxu0 0
      %454 = vmatpush1.bf16.msra.mxu0 %v401
      %455 = vmatprep.subr.bf16.mxu0 0
      %456 = vmatpush1.bf16.msra.mxu0 %v402
      %457 = vmatprep.subr.bf16.mxu0 0
      %458 = vmatpush1.bf16.msra.mxu0 %v403
      %459 = vmatprep.subr.bf16.mxu0 0
      %460 = vmatpush1.bf16.msra.mxu0 %v404
      %461 = vmatprep.subr.bf16.mxu0 0
      %462 = vmatpush1.bf16.msra.mxu0 %v405
      %463 = vmatprep.subr.bf16.mxu0 0
      %464 = vmatpush1.bf16.msra.mxu0 %v406
      %465 = vmatprep.subr.bf16.mxu0 0
      %466 = vmatpush1.bf16.msra.mxu0 %v407
      %467 = vmatprep.subr.bf16.mxu0 0
      %468 = vmatpush1.bf16.msra.mxu0 %v408
      %469 = vmatprep.subr.bf16.mxu0 0
      %470 = vmatpush1.bf16.msra.mxu0 %v409
      %471 = vmatprep.subr.bf16.mxu0 0
      %472 = vmatpush1.bf16.msra.mxu0 %v410
      %473 = vmatprep.subr.bf16.mxu0 0
      %474 = vmatpush1.bf16.msra.mxu0 %v411
      %475 = vmatprep.subr.bf16.mxu0 0
      %476 = vmatpush1.bf16.msra.mxu0 %v412
      %477 = vmatprep.mubr.bf16.mxu0 %v296
      %478 = vmatmul.mubr.bf16.gmra.mrb[0].mxu0 %v295
      %v479 = vpop.f32.mrb[0].mxu0
      %v480 = vadd.f32 %v283, %v479
      %v481 = vpop.f32.mrb[0].mxu0
      %v482 = vpop.f32.mrb[0].mxu0
      %v483 = vadd.f32 %v283, %v482
      %v484 = vpop.f32.mrb[0].mxu0
      %485 = vdwg.mxu0
      %486 = vmatprep.subr.bf16.mxu0 0
      %487 = vmatpush1.bf16.msra.mxu0 %v413
      %488 = vmatprep.subr.bf16.mxu0 0
      %489 = vmatpush1.bf16.msra.mxu0 %v414
      %490 = vmatprep.subr.bf16.mxu0 0
      %491 = vmatpush1.bf16.msra.mxu0 %v415
      %492 = vmatprep.subr.bf16.mxu0 0
      %493 = vmatpush1.bf16.msra.mxu0 %v416
      %494 = vmatprep.subr.bf16.mxu0 0
      %495 = vmatpush1.bf16.msra.mxu0 %v417
      %496 = vmatprep.subr.bf16.mxu0 0
      %497 = vmatpush1.bf16.msra.mxu0 %v418
      %498 = vmatprep.subr.bf16.mxu0 0
      %499 = vmatpush1.bf16.msra.mxu0 %v419
      %500 = vmatprep.subr.bf16.mxu0 0
      %501 = vmatpush1.bf16.msra.mxu0 %v420
      %502 = vmatprep.subr.bf16.mxu0 0
      %503 = vmatpush1.bf16.msra.mxu0 0
      %504 = vmatprep.subr.bf16.mxu0 0
      %505 = vmatpush1.bf16.msra.mxu0 0
      %506 = vmatprep.subr.bf16.mxu0 0
      %507 = vmatpush1.bf16.msra.mxu0 0
      %508 = vmatprep.subr.bf16.mxu0 0
      %509 = vmatpush1.bf16.msra.mxu0 0
      %510 = vmatprep.subr.bf16.mxu0 0
      %511 = vmatpush1.bf16.msra.mxu0 0
      %512 = vmatprep.subr.bf16.mxu0 0
      %513 = vmatpush1.bf16.msra.mxu0 0
      %514 = vmatprep.subr.bf16.mxu0 0
      %515 = vmatpush1.bf16.msra.mxu0 0
      %516 = vmatprep.subr.bf16.mxu0 0
      %517 = vmatpush1.bf16.msra.mxu0 0
      %518 = vmatprep.mubr.bf16.mxu0 0
      %519 = vmatmul.mubr.bf16.gmra.mrb[0].mxu0 %v297
      %v520 = vpop.f32.mrb[0].mxu0
      %v521 = vadd.f32 %v480, %v520
      %v522 = vpop.f32.mrb[0].mxu0
      %v523 = vpop.f32.mrb[0].mxu0
      %v524 = vadd.f32 %v483, %v523
      %v525 = vpop.f32.mrb[0].mxu0
      %526 = vdwg.mxu0
      %v527 = vmax.f32 %v521, 0.0
      %v528 = vmax.f32 %v524, 0.0
      %529 = vst [vmem:[#allocation2] sm:$0xff] 0.0
      %530 = vst [vmem:[#allocation2 + $0x18] sm:$0xff] 0.0
      %531 = vst [vmem:[#allocation2 + $0x8] sm:$0xff] %v527
      %532 = vst [vmem:[#allocation2 + $0x10] sm:$0xff] %v528
      %v533 = vld [vmem:[#allocation2 + $0x7] sm:$0xff]
      %v534 = vld [vmem:[#allocation2 + $0xf] sm:$0xff]
      %v535 = vpack.c.bf16 %v534, %v533
      %v536 = vld [vmem:[%s3] sm:$0xf]
      %v537 = vld [vmem:[%s3 + $0x4] sm:$0xf]
      %v538 = vld [vmem:[%s3 + $0x8] sm:$0xf]
      %v539 = vld [vmem:[%s3 + $0xc] sm:$0xf]
      %v540 = vld [vmem:[%s3 + $0x10] sm:$0xf]
      %v541 = vld [vmem:[%s3 + $0x14] sm:$0xf]
      %v542 = vld [vmem:[%s3 + $0x18] sm:$0xf]
      %v543 = vld [vmem:[%s3 + $0x1c] sm:$0xf]
      %v544 = vld [vmem:[%s3 + $0x20] sm:$0xf]
      %v545 = vld [vmem:[%s3 + $0x24] sm:$0xf]
      %v546 = vld [vmem:[%s3 + $0x28] sm:$0xf]
      %v547 = vld [vmem:[%s3 + $0x2c] sm:$0xf]
      %v548 = vld [vmem:[%s3 + $0x30] sm:$0xf]
      %v549 = vld [vmem:[%s3 + $0x34] sm:$0xf]
      %v550 = vld [vmem:[%s3 + $0x38] sm:$0xf]
      %v551 = vld [vmem:[%s3 + $0x3c] sm:$0xf]
      %v552 = vld [vmem:[#allocation2 + $0x8] sm:$0xff]
      %v553 = vld [vmem:[#allocation2 + $0x10] sm:$0xff]
      %v554 = vpack.c.bf16 %v553, %v552
      %s555 = scalar_lea.vmem %s3, 64
      %v556 = vld [vmem:[%s555] sm:$0xf]
      %v557 = vld [vmem:[%s555 + $0x4] sm:$0xf]
      %v558 = vld [vmem:[%s555 + $0x8] sm:$0xf]
      %v559 = vld [vmem:[%s555 + $0xc] sm:$0xf]
      %v560 = vld [vmem:[%s555 + $0x10] sm:$0xf]
      %v561 = vld [vmem:[%s555 + $0x14] sm:$0xf]
      %v562 = vld [vmem:[%s555 + $0x18] sm:$0xf]
      %v563 = vld [vmem:[%s555 + $0x1c] sm:$0xf]
      %v564 = vld [vmem:[%s555 + $0x20] sm:$0xf]
      %v565 = vld [vmem:[%s555 + $0x24] sm:$0xf]
      %v566 = vld [vmem:[%s555 + $0x28] sm:$0xf]
      %v567 = vld [vmem:[%s555 + $0x2c] sm:$0xf]
      %v568 = vld [vmem:[%s555 + $0x30] sm:$0xf]
      %v569 = vld [vmem:[%s555 + $0x34] sm:$0xf]
      %v570 = vld [vmem:[%s555 + $0x38] sm:$0xf]
      %v571 = vld [vmem:[%s555 + $0x3c] sm:$0xf]
      %v588 = vunpack.c.l.b16 %v556
      %v589 = vunpack.c.l.b16 %v557
      %v590 = vunpack.c.l.b16 %v558
      %v591 = vunpack.c.l.b16 %v559
      %v592 = vunpack.c.l.b16 %v560
      %v593 = vunpack.c.l.b16 %v561
      %v594 = vunpack.c.l.b16 %v562
      %v595 = vunpack.c.l.b16 %v563
      %v596 = vunpack.c.l.b16 %v564
      %v597 = vunpack.c.l.b16 %v565
      %v598 = vunpack.c.l.b16 %v566
      %v599 = vunpack.c.l.b16 %v567
      %v600 = vunpack.c.l.b16 %v568
      %v601 = vunpack.c.l.b16 %v569
      %v602 = vunpack.c.l.b16 %v570
      %v603 = vunpack.c.l.b16 %v571
      %v604 = vpack.c.b16 %v589, %v588
      %v605 = vpack.c.b16 %v591, %v590
      %v606 = vpack.c.b16 %v593, %v592
      %v607 = vpack.c.b16 %v595, %v594
      %v608 = vpack.c.b16 %v597, %v596
      %v609 = vpack.c.b16 %v599, %v598
      %v610 = vpack.c.b16 %v601, %v600
      %v611 = vpack.c.b16 %v603, %v602
      %620 = vmatprep.subr.bf16.mxu0 0
      %621 = vmatpush1.bf16.msra.mxu0 %v604
      %622 = vmatprep.subr.bf16.mxu0 0
      %623 = vmatpush1.bf16.msra.mxu0 %v605
      %624 = vmatprep.subr.bf16.mxu0 0
      %625 = vmatpush1.bf16.msra.mxu0 %v606
      %626 = vmatprep.subr.bf16.mxu0 0
      %627 = vmatpush1.bf16.msra.mxu0 %v607
      %628 = vmatprep.subr.bf16.mxu0 0
      %629 = vmatpush1.bf16.msra.mxu0 %v608
      %630 = vmatprep.subr.bf16.mxu0 0
      %631 = vmatpush1.bf16.msra.mxu0 %v609
      %632 = vmatprep.subr.bf16.mxu0 0
      %633 = vmatpush1.bf16.msra.mxu0 %v610
      %634 = vmatprep.subr.bf16.mxu0 0
      %635 = vmatpush1.bf16.msra.mxu0 %v611
      %636 = vmatprep.subr.bf16.mxu0 0
      %637 = vmatpush1.bf16.msra.mxu0 0
      %638 = vmatprep.subr.bf16.mxu0 0
      %639 = vmatpush1.bf16.msra.mxu0 0
      %640 = vmatprep.subr.bf16.mxu0 0
      %641 = vmatpush1.bf16.msra.mxu0 0
      %642 = vmatprep.subr.bf16.mxu0 0
      %643 = vmatpush1.bf16.msra.mxu0 0
      %644 = vmatprep.subr.bf16.mxu0 0
      %645 = vmatpush1.bf16.msra.mxu0 0
      %646 = vmatprep.subr.bf16.mxu0 0
      %647 = vmatpush1.bf16.msra.mxu0 0
      %648 = vmatprep.subr.bf16.mxu0 0
      %649 = vmatpush1.bf16.msra.mxu0 0
      %650 = vmatprep.subr.bf16.mxu0 0
      %651 = vmatpush1.bf16.msra.mxu0 0
      %652 = vmatprep.mubr.bf16.mxu0 0
      %653 = vmatmul.mubr.bf16.gmra.mrb[0].mxu0 %v554
      %v654 = vpop.f32.mrb[0].mxu0
      %v655 = vadd.f32 0.0, %v654
      %v656 = vpop.f32.mrb[0].mxu0
      %v657 = vpop.f32.mrb[0].mxu0
      %v658 = vadd.f32 0.0, %v657
      %v659 = vpop.f32.mrb[0].mxu0
      %660 = vdwg.mxu0
      %v677 = vunpack.c.l.b16 %v536
      %v678 = vunpack.c.l.b16 %v537
      %v679 = vunpack.c.l.b16 %v538
      %v680 = vunpack.c.l.b16 %v539
      %v681 = vunpack.c.l.b16 %v540
      %v682 = vunpack.c.l.b16 %v541
      %v683 = vunpack.c.l.b16 %v542
      %v684 = vunpack.c.l.b16 %v543
      %v685 = vunpack.c.l.b16 %v544
      %v686 = vunpack.c.l.b16 %v545
      %v687 = vunpack.c.l.b16 %v546
      %v688 = vunpack.c.l.b16 %v547
      %v689 = vunpack.c.l.b16 %v548
      %v690 = vunpack.c.l.b16 %v549
      %v691 = vunpack.c.l.b16 %v550
      %v692 = vunpack.c.l.b16 %v551
      %v693 = vpack.c.b16 %v678, %v677
      %v694 = vpack.c.b16 %v680, %v679
      %v695 = vpack.c.b16 %v682, %v681
      %v696 = vpack.c.b16 %v684, %v683
      %v697 = vpack.c.b16 %v686, %v685
      %v698 = vpack.c.b16 %v688, %v687
      %v699 = vpack.c.b16 %v690, %v689
      %v700 = vpack.c.b16 %v692, %v691
      %709 = vmatprep.subr.bf16.mxu0 0
      %710 = vmatpush1.bf16.msra.mxu0 %v693
      %711 = vmatprep.subr.bf16.mxu0 0
      %712 = vmatpush1.bf16.msra.mxu0 %v694
      %713 = vmatprep.subr.bf16.mxu0 0
      %714 = vmatpush1.bf16.msra.mxu0 %v695
      %715 = vmatprep.subr.bf16.mxu0 0
      %716 = vmatpush1.bf16.msra.mxu0 %v696
      %717 = vmatprep.subr.bf16.mxu0 0
      %718 = vmatpush1.bf16.msra.mxu0 %v697
      %719 = vmatprep.subr.bf16.mxu0 0
      %720 = vmatpush1.bf16.msra.mxu0 %v698
      %721 = vmatprep.subr.bf16.mxu0 0
      %722 = vmatpush1.bf16.msra.mxu0 %v699
      %723 = vmatprep.subr.bf16.mxu0 0
      %724 = vmatpush1.bf16.msra.mxu0 %v700
      %725 = vmatprep.subr.bf16.mxu0 0
      %726 = vmatpush1.bf16.msra.mxu0 0
      %727 = vmatprep.subr.bf16.mxu0 0
      %728 = vmatpush1.bf16.msra.mxu0 0
      %729 = vmatprep.subr.bf16.mxu0 0
      %730 = vmatpush1.bf16.msra.mxu0 0
      %731 = vmatprep.subr.bf16.mxu0 0
      %732 = vmatpush1.bf16.msra.mxu0 0
      %733 = vmatprep.subr.bf16.mxu0 0
      %734 = vmatpush1.bf16.msra.mxu0 0
      %735 = vmatprep.subr.bf16.mxu0 0
      %736 = vmatpush1.bf16.msra.mxu0 0
      %737 = vmatprep.subr.bf16.mxu0 0
      %738 = vmatpush1.bf16.msra.mxu0 0
      %739 = vmatprep.subr.bf16.mxu0 0
      %740 = vmatpush1.bf16.msra.mxu0 0
      %741 = vmatprep.mubr.bf16.mxu0 0
      %742 = vmatmul.mubr.bf16.gmra.mrb[0].mxu0 %v535
      %v743 = vpop.f32.mrb[0].mxu0
      %v744 = vadd.f32 %v655, %v743
      %v745 = vpop.f32.mrb[0].mxu0
      %v746 = vpop.f32.mrb[0].mxu0
      %v747 = vadd.f32 %v658, %v746
      %v748 = vpop.f32.mrb[0].mxu0
      %749 = vdwg.mxu0
      %v750 = vld [vmem:[#allocation2 + $0x9] sm:$0xff]
      %v751 = vld [vmem:[#allocation2 + $0x11] sm:$0xff]
      %v752 = vpack.c.bf16 %v751, %v750
      %s753 = scalar_lea.vmem %s3, 128
      %v754 = vld [vmem:[%s753] sm:$0xf]
      %v755 = vld [vmem:[%s753 + $0x4] sm:$0xf]
      %v756 = vld [vmem:[%s753 + $0x8] sm:$0xf]
      %v757 = vld [vmem:[%s753 + $0xc] sm:$0xf]
      %v758 = vld [vmem:[%s753 + $0x10] sm:$0xf]
      %v759 = vld [vmem:[%s753 + $0x14] sm:$0xf]
      %v760 = vld [vmem:[%s753 + $0x18] sm:$0xf]
      %v761 = vld [vmem:[%s753 + $0x1c] sm:$0xf]
      %v762 = vld [vmem:[%s753 + $0x20] sm:$0xf]
      %v763 = vld [vmem:[%s753 + $0x24] sm:$0xf]
      %v764 = vld [vmem:[%s753 + $0x28] sm:$0xf]
      %v765 = vld [vmem:[%s753 + $0x2c] sm:$0xf]
      %v766 = vld [vmem:[%s753 + $0x30] sm:$0xf]
      %v767 = vld [vmem:[%s753 + $0x34] sm:$0xf]
      %v768 = vld [vmem:[%s753 + $0x38] sm:$0xf]
      %v769 = vld [vmem:[%s753 + $0x3c] sm:$0xf]
      %v786 = vunpack.c.l.b16 %v754
      %v787 = vunpack.c.l.b16 %v755
      %v788 = vunpack.c.l.b16 %v756
      %v789 = vunpack.c.l.b16 %v757
      %v790 = vunpack.c.l.b16 %v758
      %v791 = vunpack.c.l.b16 %v759
      %v792 = vunpack.c.l.b16 %v760
      %v793 = vunpack.c.l.b16 %v761
      %v794 = vunpack.c.l.b16 %v762
      %v795 = vunpack.c.l.b16 %v763
      %v796 = vunpack.c.l.b16 %v764
      %v797 = vunpack.c.l.b16 %v765
      %v798 = vunpack.c.l.b16 %v766
      %v799 = vunpack.c.l.b16 %v767
      %v800 = vunpack.c.l.b16 %v768
      %v801 = vunpack.c.l.b16 %v769
      %v802 = vpack.c.b16 %v787, %v786
      %v803 = vpack.c.b16 %v789, %v788
      %v804 = vpack.c.b16 %v791, %v790
      %v805 = vpack.c.b16 %v793, %v792
      %v806 = vpack.c.b16 %v795, %v794
      %v807 = vpack.c.b16 %v797, %v796
      %v808 = vpack.c.b16 %v799, %v798
      %v809 = vpack.c.b16 %v801, %v800
      %818 = vmatprep.subr.bf16.mxu0 0
      %819 = vmatpush1.bf16.msra.mxu0 %v802
      %820 = vmatprep.subr.bf16.mxu0 0
      %821 = vmatpush1.bf16.msra.mxu0 %v803
      %822 = vmatprep.subr.bf16.mxu0 0
      %823 = vmatpush1.bf16.msra.mxu0 %v804
      %824 = vmatprep.subr.bf16.mxu0 0
      %825 = vmatpush1.bf16.msra.mxu0 %v805
      %826 = vmatprep.subr.bf16.mxu0 0
      %827 = vmatpush1.bf16.msra.mxu0 %v806
      %828 = vmatprep.subr.bf16.mxu0 0
      %829 = vmatpush1.bf16.msra.mxu0 %v807
      %830 = vmatprep.subr.bf16.mxu0 0
      %831 = vmatpush1.bf16.msra.mxu0 %v808
      %832 = vmatprep.subr.bf16.mxu0 0
      %833 = vmatpush1.bf16.msra.mxu0 %v809
      %834 = vmatprep.subr.bf16.mxu0 0
      %835 = vmatpush1.bf16.msra.mxu0 0
      %836 = vmatprep.subr.bf16.mxu0 0
      %837 = vmatpush1.bf16.msra.mxu0 0
      %838 = vmatprep.subr.bf16.mxu0 0
      %839 = vmatpush1.bf16.msra.mxu0 0
      %840 = vmatprep.subr.bf16.mxu0 0
      %841 = vmatpush1.bf16.msra.mxu0 0
      %842 = vmatprep.subr.bf16.mxu0 0
      %843 = vmatpush1.bf16.msra.mxu0 0
      %844 = vmatprep.subr.bf16.mxu0 0
      %845 = vmatpush1.bf16.msra.mxu0 0
      %846 = vmatprep.subr.bf16.mxu0 0
      %847 = vmatpush1.bf16.msra.mxu0 0
      %848 = vmatprep.subr.bf16.mxu0 0
      %849 = vmatpush1.bf16.msra.mxu0 0
      %850 = vmatprep.mubr.bf16.mxu0 0
      %851 = vmatmul.mubr.bf16.gmra.mrb[0].mxu0 %v752
      %v852 = vpop.f32.mrb[0].mxu0
      %v853 = vadd.f32 0.0, %v852
      %v854 = vpop.f32.mrb[0].mxu0
      %v855 = vpop.f32.mrb[0].mxu0
      %v856 = vadd.f32 0.0, %v855
      %v857 = vpop.f32.mrb[0].mxu0
      %858 = vdwg.mxu0
      %v859 = vadd.f32 %v744, %v853
      %v860 = vadd.f32 %v747, %v856
      %v861 = vld [vmem:[%s219 + $0x4] sm:$0xf]
      %v862 = vld [vmem:[%s219 + $0x10] sm:$0xf]
      %v863 = vunpack.c.l.bf16 %v861
      %v864 = vunpack.c.l.bf16 %v862
      %v865 = vld [vmem:[%s4] sm:$0x1]
      %v867 = vlaneseq
      %v868 = vshrl.u32 %v867, 7
      %v869 = vsub.s32 0, %v868
      %v870 = vrot.slane %v865, %v869
      %v872 = vadd.f32 %v859, %v870
      %v873 = vadd.f32 %v860, %v870
      %v874 = vadd.f32 %v872, %v863
      %v875 = vadd.f32 %v873, %v864
      %v876 = vmax.f32 %v874, 0.0
      %v877 = vmax.f32 %v875, 0.0
      %878 = vst [vmem:[%s224] sm:$0xff] %v876
      %879 = vst [vmem:[%s224 + $0x8] sm:$0xff] %v877
      %p880 = scmp.lt.s32.totalorder %s16, 1
      %s881 = scalar_select %p880, %s16, 1
      %s882 = smul.addr %s881, 2
      %s883 = smul.addr %s882, 8
      %s884 = scalar_lea.vmem %s5, %s883
      // Predicated region
      $region41: #{resnet_block_forward.1} parent=39 // pred_check
        %p885 = pneg %p144
      $region42: #{resnet_block_forward.1} parent=39 // pred_check_branch
        %887 = sbr.rel (%p885) target = $region44
      $region43: #{resnet_block_forward.1} parent=39 // pred_region
        _
      $region44: #{resnet_block_forward.1} parent=39 // pred_fallthru
        _
    $region40: #{resnet_block_forward.1} parent=5 // pred_fallthru
      _
    %p888 = scmp.le.s32.totalorder 2, %s11
    // Predicated region
    $region45: #{resnet_block_forward.1} parent=5 // pred_check
      %p889 = pneg %p888
    $region46: #{resnet_block_forward.1} parent=5 // pred_check_branch
      %891 = sbr.rel (%p889) target = $region48
    $region47: #{resnet_block_forward.1} parent=5 // pred_region
      %s892 = ssub.s32 %s11, 2
      // Predicated region
      $region49: #{resnet_block_forward.1} parent=47 // pred_check
        %p893 = pneg %p150
      $region50: #{resnet_block_forward.1} parent=47 // pred_check_branch
        %895 = sbr.rel (%p893) target = $region52
      $region51: #{resnet_block_forward.1} parent=47 // pred_region
        %p896 = scmp.lt.s32.totalorder %s17, 1
        %s897 = scalar_select %p896, %s17, 1
        %s898 = smul.addr %s897, 2
        %s899 = smul.addr %s898, 8
        %s900 = scalar_lea.vmem %s5, %s899
      $region52: #{resnet_block_forward.1} parent=47 // pred_fallthru
        _
    $region48: #{resnet_block_forward.1} parent=5 // pred_fallthru
      _
  $region6: #{resnet_block_forward.1} parent=0 // loop_footer
    %s15 = sadd.s32 1, %s11
  $region7: #{resnet_block_forward.1} parent=0 // loop_footer_branch
    %10 = sbr.rel target = $region3
  $region8: #{resnet_block_forward.1} parent=0 // loop_exit
    _

</llo_original>
